<compile_context>
chip_gen: v6e
topology: v6e:2x2x1
jax: 0.10.0
libtpu: 0.0.40
codegen_flags: <defaults>
</compile_context>

<pallas_src>
import jax
import jax.numpy as jnp
from jax.experimental import pallas as pl
from jax.experimental.pallas import tpu as pltpu


def _round_up(x: int, m: int) -> int:
    return (x + m - 1) // m * m


def _vmem_budget_bytes() -> int:
    """Generation-aware VMEM footprint budget (v7x: ~48 MiB, v5e/v6e: ~96 MiB)."""
    cap = 64 * 1024 * 1024
    try:
        info = pltpu.get_tpu_info()
        cap = int(getattr(info, "vmem_capacity_bytes", cap))
    except Exception:
        pass
    return min(cap * 3 // 4, 96 * 1024 * 1024)


def _plan_layout(n_elems: int, n_stems: int, budget_bytes: int):
    """Lane-dense (rows, lanes) layout + row tile sized from the VMEM budget."""
    lanes = 1024
    while lanes > 128 and n_elems < lanes * 8:
        lanes //= 2
    rows = -(-n_elems // lanes)
    rows_pad8 = _round_up(rows, 8)

    # Per grid step the fused kernel holds (S inputs + S aug + 1 mix) tiles,
    # double-buffered, plus a tiny max tile.  Leave ~20% headroom.
    n_bufs = 2 * (2 * n_stems + 1) + 2
    tile_budget = max((budget_bytes * 4 // 5) // n_bufs, 8 * lanes * 4)
    rows_per_tile = max(8, (tile_budget // (lanes * 4)) // 8 * 8)
    rows_per_tile = min(rows_per_tile, rows_pad8)

    # v7x megacore: prefer >=2 row tiles when there is enough data to split.
    if rows_pad8 >= 16 and rows_per_tile >= rows_pad8:
        rows_per_tile = _round_up(-(-rows_pad8 // 2), 8)

    padded_rows = _round_up(rows_pad8, rows_per_tile)
    n_tiles = padded_rows // rows_per_tile
    return lanes, rows_per_tile, n_tiles, padded_rows


def _make_fused_kernel(n_stems: int):
    """Grid = (n_row_tiles,). All S stems processed in one body per row tile.

    refs layout: gains (SMEM (S,)), x_0..x_{S-1} (VMEM tiles),
                 aug_0..aug_{S-1}, mix, tile_max (VMEM (1,8,128)).
    """

    def kernel(*refs):
        gains_ref = refs[0]
        x_refs = refs[1:1 + n_stems]
        aug_refs = refs[1 + n_stems:1 + 2 * n_stems]
        mix_ref = refs[1 + 2 * n_stems]
        tmax_ref = refs[2 + 2 * n_stems]

        mix = None
        amax = None
        for i in range(n_stems):            # static loop — S stores + 1 mix store
            a = x_refs[i][...] * gains_ref[i]
            aug_refs[i][...] = a
            mix = a if mix is None else mix + a
            ab = jnp.abs(a)
            amax = ab if amax is None else jnp.maximum(amax, ab)
        mix_ref[...] = mix
        amax = jnp.maximum(amax, jnp.abs(mix))
        m = jnp.max(amax)                    # single cross-lane reduce per tile
        tmax_ref[...] = jnp.full(tmax_ref.shape, m, dtype=tmax_ref.dtype)

    return kernel


def augment_and_mix(planes, gains, *, rows_per_tile: int, vmem_limit: int):
    """planes: list of S (R, L) f32 lane-dense stem planes; gains: (S,) f32.

    Returns (aug_0, ..., aug_{S-1}, mixture, tile_max).
    """
    n_stems = len(planes)
    R, L = planes[0].shape
    n_tiles = R // rows_per_tile

    plane_spec = pl.BlockSpec((rows_per_tile, L), lambda t: (t, 0))
    in_specs = [pl.BlockSpec(memory_space=pltpu.MemorySpace.SMEM)]  # gains
    in_specs += [plane_spec] * n_stems
    out_specs = [plane_spec] * (n_stems + 1)                        # aug stems + mix
    out_specs += [pl.BlockSpec((1, 8, 128), lambda t: (t, 0, 0))]   # per-tile max
    out_shapes = tuple(
        [jax.ShapeDtypeStruct((R, L), planes[0].dtype)] * (n_stems + 1)
        + [jax.ShapeDtypeStruct((n_tiles, 8, 128), jnp.float32)]
    )

    grid_spec = pltpu.PrefetchScalarGridSpec(
        num_scalar_prefetch=0,
        grid=(n_tiles,),
        in_specs=in_specs,
        out_specs=out_specs,
    )
    return pl.pallas_call(
        _make_fused_kernel(n_stems),
        grid_spec=grid_spec,
        out_shape=out_shapes,
        compiler_params=pltpu.CompilerParams(
            dimension_semantics=("parallel",),
            vmem_limit_bytes=vmem_limit),
    )(gains, *planes)


class StemAugmentor:
    """JAX/Pallas port of StemAugmentor.forward (synthetic per-stem gains)."""

    def __init__(self, stem_gains, fix_clipping=True, scaler_margin=0.5):
        self.stem_gains = stem_gains          # dict: stem -> gain (default 1.0)
        self.fix_clipping = fix_clipping
        self.scaler_margin = scaler_margin

    def __call__(self, item, rng_key):
        audio = item["audio"]
        stems = [s for s in audio if s != "mixture"]
        shape = audio[stems[0]].shape
        n = 1
        for d in shape:
            n *= int(d)

        budget = _vmem_budget_bytes()
        lanes, rows_per_tile, _, padded_rows = _plan_layout(n, len(stems), budget)
        padded_n = padded_rows * lanes

        # Lane/sublane-dense layout per stem: flatten and fold into (rows, lanes)
        # with rows % 8 == 0 and lanes % 128 == 0.  The pad is a no-op whenever
        # n is already aligned; padding zeros are neutral for gain/sum/max.
        planes = []
        for s in stems:
            flat = audio[s].reshape(-1).astype(jnp.float32)
            if padded_n != n:
                flat = jnp.pad(flat, (0, padded_n - n))
            planes.append(flat.reshape(padded_rows, lanes))
        gains = jnp.array(
            [float(self.stem_gains.get(s, 1.0)) for s in stems], dtype=jnp.float32)

        outs = augment_and_mix(planes, gains,
                               rows_per_tile=rows_per_tile, vmem_limit=budget)
        aug_planes = outs[:len(stems)]
        mix_plane = outs[len(stems)]
        tile_max = outs[len(stems) + 1]

        # Clipping fix fused into the unpad/reshape epilogue (no second sweep).
        if self.fix_clipping:
            max_abs = jnp.max(tile_max)
            r = jax.random.uniform(rng_key, (), dtype=jnp.float32) * self.scaler_margin
            scaler = jnp.where(max_abs > 1.0, 1.0 / (max_abs + r), jnp.float32(1.0))
        else:
            scaler = jnp.float32(1.0)

        out = {}
        for i, s in enumerate(stems):
            out[s] = (aug_planes[i] * scaler).reshape(-1)[:n].reshape(shape)
        out["mixture"] = (mix_plane * scaler).reshape(-1)[:n].reshape(shape)
        return {"audio": out}


def _reference(item, stem_gains, fix_clipping, scaler_margin, rng_key):
    """Pure-JAX reference with identical semantics."""
    audio = item["audio"]
    stems = [s for s in audio if s != "mixture"]
    aug = {s: audio[s] * jnp.float32(stem_gains.get(s, 1.0)) for s in stems}
    mixture = sum(aug[s] for s in stems)
    out = dict(aug)
    out["mixture"] = mixture
    if fix_clipping:
        max_abs = jnp.max(jnp.stack([jnp.max(jnp.abs(out[s])) for s in out]))
        r = jax.random.uniform(rng_key, (), dtype=jnp.float32) * scaler_margin
        scaler = jnp.where(max_abs > 1.0, 1.0 / (max_abs + r), jnp.float32(1.0))
        out = {s: out[s] * scaler for s in out}
    return {"audio": out}


if __name__ == "__main__":
    key = jax.random.PRNGKey(0)
    k_data, k_clip = jax.random.split(key)

    B, C, T = 2, 2, 256
    stem_names = ["speech", "drums", "bass", "other"]
    stem_keys = jax.random.split(k_data, len(stem_names))

    stem_gains = {"speech": 0.9, "drums": 1.1, "bass": 0.8, "other": 1.2}
    augmentor = StemAugmentor(stem_gains, fix_clipping=True, scaler_margin=0.5)

    # Exercise both the clipping and the no-clip paths.
    for amp, tag in [(0.5, "clipping"), (0.02, "no-clip")]:
        audio = {
            s: (jax.random.normal(k, (B, C, T), dtype=jnp.float32) * amp)
            for s, k in zip(stem_names, stem_keys)
        }
        audio["mixture"] = jnp.zeros((B, C, T), dtype=jnp.float32)
        item = {"audio": audio}

        out = augmentor(item, k_clip)
        jax.block_until_ready(out["audio"]["mixture"])

        ref = _reference(item, stem_gains, True, 0.5, k_clip)
        for s in out["audio"]:
            assert jnp.allclose(out["audio"][s], ref["audio"][s],
                                rtol=1e-6, atol=1e-6), f"mismatch on {tag}/{s}"

    print("KERNEL_OK")
</pallas_src>

<mosaic_0001>
module attributes {stable_mosaic.version = 11 : i64} {
  func.func @kernel(%arg0: i32, %arg1: memref<4xf32, #tpu.memory_space<smem>>, %arg2: memref<8x128xf32, #tpu.memory_space<vmem>>, %arg3: memref<8x128xf32, #tpu.memory_space<vmem>>, %arg4: memref<8x128xf32, #tpu.memory_space<vmem>>, %arg5: memref<8x128xf32, #tpu.memory_space<vmem>>, %arg6: memref<8x128xf32, #tpu.memory_space<vmem>>, %arg7: memref<8x128xf32, #tpu.memory_space<vmem>>, %arg8: memref<8x128xf32, #tpu.memory_space<vmem>>, %arg9: memref<8x128xf32, #tpu.memory_space<vmem>>, %arg10: memref<8x128xf32, #tpu.memory_space<vmem>>, %arg11: memref<1x8x128xf32, #tpu.memory_space<vmem>>) attributes {dimension_semantics = [#tpu.dimension_semantics<parallel>], iteration_bounds = array<i64: 1>, scalar_prefetch = 0 : i64, scratch_operands = 0 : i64, tpu.core_type = #tpu.core_type<tc>, window_params = [{transform_indices = @transform_0, window_bounds = array<i64: 4>}, {transform_indices = @transform_1, window_bounds = array<i64: 8, 128>}, {transform_indices = @transform_2, window_bounds = array<i64: 8, 128>}, {transform_indices = @transform_3, window_bounds = array<i64: 8, 128>}, {transform_indices = @transform_4, window_bounds = array<i64: 8, 128>}, {transform_indices = @transform_5, window_bounds = array<i64: 8, 128>}, {transform_indices = @transform_6, window_bounds = array<i64: 8, 128>}, {transform_indices = @transform_7, window_bounds = array<i64: 8, 128>}, {transform_indices = @transform_8, window_bounds = array<i64: 8, 128>}, {transform_indices = @transform_9, window_bounds = array<i64: 8, 128>}, {transform_indices = @transform_10, window_bounds = array<i64: 1, 8, 128>}]} {
    %c0 = arith.constant 0 : index
    %c0_0 = arith.constant 0 : index
    %0 = vector.load %arg2[%c0, %c0_0] : memref<8x128xf32, #tpu.memory_space<vmem>>, vector<8x128xf32>
    %c0_1 = arith.constant 0 : index
    %1 = memref.load %arg1[%c0_1] : memref<4xf32, #tpu.memory_space<smem>>
    %2 = vector.broadcast %1 : f32 to vector<8x128xf32>
    %3 = arith.mulf %0, %2 : vector<8x128xf32>
    %c0_2 = arith.constant 0 : index
    %c0_3 = arith.constant 0 : index
    %4 = vector.load %arg6[%c0_2, %c0_3] : memref<8x128xf32, #tpu.memory_space<vmem>>, vector<8x128xf32>
    tpu.vector_store %arg6[%c0_2, %c0_3], %3 {strides = array<i32>} : memref<8x128xf32, #tpu.memory_space<vmem>>, vector<8x128xf32>,
    %5 = math.absf %3 : vector<8x128xf32>
    %c0_4 = arith.constant 0 : index
    %c0_5 = arith.constant 0 : index
    %6 = vector.load %arg3[%c0_4, %c0_5] : memref<8x128xf32, #tpu.memory_space<vmem>>, vector<8x128xf32>
    %c1 = arith.constant 1 : index
    %7 = memref.load %arg1[%c1] : memref<4xf32, #tpu.memory_space<smem>>
    %8 = vector.broadcast %7 : f32 to vector<8x128xf32>
    %9 = arith.mulf %6, %8 : vector<8x128xf32>
    %c0_6 = arith.constant 0 : index
    %c0_7 = arith.constant 0 : index
    %10 = vector.load %arg7[%c0_6, %c0_7] : memref<8x128xf32, #tpu.memory_space<vmem>>, vector<8x128xf32>
    tpu.vector_store %arg7[%c0_6, %c0_7], %9 {strides = array<i32>} : memref<8x128xf32, #tpu.memory_space<vmem>>, vector<8x128xf32>,
    %11 = arith.addf %3, %9 : vector<8x128xf32>
    %12 = math.absf %9 : vector<8x128xf32>
    %13 = arith.maximumf %5, %12 : vector<8x128xf32>
    %c0_8 = arith.constant 0 : index
    %c0_9 = arith.constant 0 : index
    %14 = vector.load %arg4[%c0_8, %c0_9] : memref<8x128xf32, #tpu.memory_space<vmem>>, vector<8x128xf32>
    %c2 = arith.constant 2 : index
    %15 = memref.load %arg1[%c2] : memref<4xf32, #tpu.memory_space<smem>>
    %16 = vector.broadcast %15 : f32 to vector<8x128xf32>
    %17 = arith.mulf %14, %16 : vector<8x128xf32>
    %c0_10 = arith.constant 0 : index
    %c0_11 = arith.constant 0 : index
    %18 = vector.load %arg8[%c0_10, %c0_11] : memref<8x128xf32, #tpu.memory_space<vmem>>, vector<8x128xf32>
    tpu.vector_store %arg8[%c0_10, %c0_11], %17 {strides = array<i32>} : memref<8x128xf32, #tpu.memory_space<vmem>>, vector<8x128xf32>,
    %19 = arith.addf %11, %17 : vector<8x128xf32>
    %20 = math.absf %17 : vector<8x128xf32>
    %21 = arith.maximumf %13, %20 : vector<8x128xf32>
    %c0_12 = arith.constant 0 : index
    %c0_13 = arith.constant 0 : index
    %22 = vector.load %arg5[%c0_12, %c0_13] : memref<8x128xf32, #tpu.memory_space<vmem>>, vector<8x128xf32>
    %c3 = arith.constant 3 : index
    %23 = memref.load %arg1[%c3] : memref<4xf32, #tpu.memory_space<smem>>
    %24 = vector.broadcast %23 : f32 to vector<8x128xf32>
    %25 = arith.mulf %22, %24 : vector<8x128xf32>
    %c0_14 = arith.constant 0 : index
    %c0_15 = arith.constant 0 : index
    %26 = vector.load %arg9[%c0_14, %c0_15] : memref<8x128xf32, #tpu.memory_space<vmem>>, vector<8x128xf32>
    tpu.vector_store %arg9[%c0_14, %c0_15], %25 {strides = array<i32>} : memref<8x128xf32, #tpu.memory_space<vmem>>, vector<8x128xf32>,
    %27 = arith.addf %19, %25 : vector<8x128xf32>
    %28 = math.absf %25 : vector<8x128xf32>
    %29 = arith.maximumf %21, %28 : vector<8x128xf32>
    %c0_16 = arith.constant 0 : index
    %c0_17 = arith.constant 0 : index
    %30 = vector.load %arg10[%c0_16, %c0_17] : memref<8x128xf32, #tpu.memory_space<vmem>>, vector<8x128xf32>
    tpu.vector_store %arg10[%c0_16, %c0_17], %27 {strides = array<i32>} : memref<8x128xf32, #tpu.memory_space<vmem>>, vector<8x128xf32>,
    %31 = math.absf %27 : vector<8x128xf32>
    %32 = arith.maximumf %29, %31 : vector<8x128xf32>
    %33 = vector.shape_cast %32 : vector<8x128xf32> to vector<1x8x128xf32>
    %cst = arith.constant dense<0xFF800000> : vector<1xf32>
    %34 = vector.multi_reduction <maximumf>, %33, %cst [1, 2] : vector<1x8x128xf32> to vector<1xf32>
    %35 = vector.shape_cast %34 : vector<1xf32> to vector<1x1x1xf32>
    %36 = vector.extract %35[0, 0, 0] : f32 from vector<1x1x1xf32>
    %37 = vector.broadcast %36 : f32 to vector<1x8x128xf32>
    %c0_18 = arith.constant 0 : index
    %c0_19 = arith.constant 0 : index
    %c0_20 = arith.constant 0 : index
    %38 = vector.load %arg11[%c0_18, %c0_19, %c0_20] : memref<1x8x128xf32, #tpu.memory_space<vmem>>, vector<1x8x128xf32>
    tpu.vector_store %arg11[%c0_18, %c0_19, %c0_20], %37 {strides = array<i32>} : memref<1x8x128xf32, #tpu.memory_space<vmem>>, vector<1x8x128xf32>,
    return
  }
  func.func @transform_0(%arg0: i32) -> i32 {
    %c0_i32 = arith.constant 0 : i32
    %c0_i32_0 = arith.constant 0 : i32
    return %c0_i32 : i32
  }
  func.func @transform_1(%arg0: i32) -> (i32, i32) {
    %c0_i32 = arith.constant 0 : i32
    %c0_i32_0 = arith.constant 0 : i32
    return %arg0, %c0_i32 : i32, i32
  }
  func.func @transform_2(%arg0: i32) -> (i32, i32) {
    %c0_i32 = arith.constant 0 : i32
    %c0_i32_0 = arith.constant 0 : i32
    return %arg0, %c0_i32 : i32, i32
  }
  func.func @transform_3(%arg0: i32) -> (i32, i32) {
    %c0_i32 = arith.constant 0 : i32
    %c0_i32_0 = arith.constant 0 : i32
    return %arg0, %c0_i32 : i32, i32
  }
  func.func @transform_4(%arg0: i32) -> (i32, i32) {
    %c0_i32 = arith.constant 0 : i32
    %c0_i32_0 = arith.constant 0 : i32
    return %arg0, %c0_i32 : i32, i32
  }
  func.func @transform_5(%arg0: i32) -> (i32, i32) {
    %c0_i32 = arith.constant 0 : i32
    %c0_i32_0 = arith.constant 0 : i32
    return %arg0, %c0_i32 : i32, i32
  }
  func.func @transform_6(%arg0: i32) -> (i32, i32) {
    %c0_i32 = arith.constant 0 : i32
    %c0_i32_0 = arith.constant 0 : i32
    return %arg0, %c0_i32 : i32, i32
  }
  func.func @transform_7(%arg0: i32) -> (i32, i32) {
    %c0_i32 = arith.constant 0 : i32
    %c0_i32_0 = arith.constant 0 : i32
    return %arg0, %c0_i32 : i32, i32
  }
  func.func @transform_8(%arg0: i32) -> (i32, i32) {
    %c0_i32 = arith.constant 0 : i32
    %c0_i32_0 = arith.constant 0 : i32
    return %arg0, %c0_i32 : i32, i32
  }
  func.func @transform_9(%arg0: i32) -> (i32, i32) {
    %c0_i32 = arith.constant 0 : i32
    %c0_i32_0 = arith.constant 0 : i32
    return %arg0, %c0_i32 : i32, i32
  }
  func.func @transform_10(%arg0: i32) -> (i32, i32, i32) {
    %c0_i32 = arith.constant 0 : i32
    %c0_i32_0 = arith.constant 0 : i32
    %c0_i32_1 = arith.constant 0 : i32
    return %arg0, %c0_i32, %c0_i32_0 : i32, i32, i32
  }
}

</mosaic_0001>

<llo_original>
// kernel: tpu_custom_call.1
$region0: #{tpu_custom_call.1}
  #allocation0 [shape = 'u32[]', space=smem, size = 0x4, offset = 0x4, fixed_abs, tag = 'smem constant byte address 0x4 - core index']
  #allocation1 [shape = 'u32[144,128]{1,0:T(1,128)}', space=vmem, size = 0x12000, scoped, tag = 'internal scratch']
  %s0 = inlined_call_operand.hbm [shape: f32[4], index: 0, kind: input, shape index: {}]
  %s1 = inlined_call_operand.hbm [shape: f32[8,128], index: 1, kind: input, shape index: {}]
  %s2 = inlined_call_operand.hbm [shape: f32[8,128], index: 2, kind: input, shape index: {}]
  %s3 = inlined_call_operand.hbm [shape: f32[8,128], index: 3, kind: input, shape index: {}]
  %s4 = inlined_call_operand.hbm [shape: f32[8,128], index: 4, kind: input, shape index: {}]
  %s5 = inlined_call_operand.hbm [shape: f32[8,128], index: 5, kind: output, shape index: {0}]
  %s6 = inlined_call_operand.hbm [shape: f32[8,128], index: 6, kind: output, shape index: {1}]
  %s7 = inlined_call_operand.hbm [shape: f32[8,128], index: 7, kind: output, shape index: {2}]
  %s8 = inlined_call_operand.hbm [shape: f32[8,128], index: 8, kind: output, shape index: {3}]
  %s9 = inlined_call_operand.hbm [shape: f32[8,128], index: 9, kind: output, shape index: {4}]
  %s10 = inlined_call_operand.hbm [shape: f32[1,8,128], index: 10, kind: output, shape index: {5}]
  %11 = xla_tuple %s5, %s6, %s7, %s8, %s9, %s10
  %s12 = sld [smem:[#allocation0]]
  $region90: #{tpu_custom_call.1} parent=0
    _
  %s14 = ssub.s32 1, %s12
  %s15 = scalar_select 0, %s14, %s12
  $region1: #{tpu_custom_call.1} parent=0
    #allocation2 [shape = 'u8[512]{0}', space=smem, size = 0x200, scoped, tag = 'input window, operand 0, single buffered']
    #allocation3 [shape = 's32[1]{0}', space=sflag, size = 0x4, scoped, tag = 'scoped memory for tpu_custom_call.1']
    #allocation4 [shape = 's32[1]{0}', space=sflag, size = 0x4, scoped, tag = 'scoped memory for tpu_custom_call.1']
    #allocation5 [shape = 's32[1]{0}', space=sflag, size = 0x4, scoped, tag = 'scoped memory for tpu_custom_call.1']
    #allocation6 [shape = 'u8[4096]{0}', space=vmem, size = 0x1000, scoped, tag = 'input window, operand 1, single buffered']
    #allocation7 [shape = 'u8[4096]{0}', space=vmem, size = 0x1000, scoped, tag = 'input window, operand 2, single buffered']
    #allocation8 [shape = 's32[1]{0}', space=sflag, size = 0x4, scoped, tag = 'scoped memory for tpu_custom_call.1']
    #allocation9 [shape = 'u8[4096]{0}', space=vmem, size = 0x1000, scoped, tag = 'input window, operand 3, single buffered']
    #allocation10 [shape = 'u8[4096]{0}', space=vmem, size = 0x1000, scoped, tag = 'input window, operand 4, single buffered']
    #allocation11 [shape = 's32[1]{0}', space=sflag, size = 0x4, scoped, tag = 'scoped memory for tpu_custom_call.1']
    #allocation12 [shape = 'u8[4096]{0}', space=vmem, size = 0x1000, scoped, tag = 'output window, operand 0, single buffered']
    #allocation13 [shape = 'u8[4096]{0}', space=vmem, size = 0x1000, scoped, tag = 'output window, operand 1, single buffered']
    #allocation14 [shape = 's32[1]{0}', space=sflag, size = 0x4, scoped, tag = 'scoped memory for tpu_custom_call.1']
    #allocation15 [shape = 'u8[4096]{0}', space=vmem, size = 0x1000, scoped, tag = 'output window, operand 2, single buffered']
    #allocation16 [shape = 'u8[4096]{0}', space=vmem, size = 0x1000, scoped, tag = 'output window, operand 3, single buffered']
    #allocation17 [shape = 's32[1]{0}', space=sflag, size = 0x4, scoped, tag = 'scoped memory for tpu_custom_call.1']
    #allocation18 [shape = 'u8[4096]{0}', space=vmem, size = 0x1000, scoped, tag = 'output window, operand 4, single buffered']
    #allocation19 [shape = 'u8[4096]{0}', space=vmem, size = 0x1000, scoped, tag = 'output window, operand 5, single buffered']
    #allocation20 [shape = 's32[1]{0}', space=sflag, size = 0x4, scoped, tag = 'scoped memory for tpu_custom_call.1']
    %16 = vsyncpa [#allocation5], 0
    %17 = vsyncpa [#allocation3], 0
    %18 = vsyncpa [#allocation8], 0
    %19 = vsyncpa [#allocation11], 0
    %20 = vsyncpa [#allocation4], 0
    %21 = vsyncpa [#allocation14], 0
    %22 = vsyncpa [#allocation17], 0
    %23 = vsyncpa [#allocation20], 0
    // Predicated region
    $region2: #{tpu_custom_call.1} parent=1 // pred_check
      _
    $region3: #{tpu_custom_call.1} parent=1 // pred_check_branch
      %25 = sbr.rel (0) target = $region5
    $region4: #{tpu_custom_call.1} parent=1 // pred_region
      %s27 = ssub.s32 16, 16
      %28 = vsyncadd [#allocation5], %s27
      %31 = dma.hbm_to_smem %s0, 16, [#allocation2], [#allocation5]
    $region5: #{tpu_custom_call.1} parent=1 // pred_fallthru
      _
    // Predicated region
    $region6: #{tpu_custom_call.1} parent=1 // pred_check
      _
    $region7: #{tpu_custom_call.1} parent=1 // pred_check_branch
      %33 = sbr.rel (0) target = $region9
    $region8: #{tpu_custom_call.1} parent=1 // pred_region
      %s35 = ssub.s32 128, 128
      %36 = vsyncadd [#allocation3], %s35
      %s38 = sshll.u32 [#allocation6], 4
      %s39 = int_to_ptr.vmem [resolvable:$true] %s38
      %41 = dma.hbm_to_vmem [thread:$0]  %s1, 128, %s39, [#allocation3]
    $region9: #{tpu_custom_call.1} parent=1 // pred_fallthru
      _
    // Predicated region
    $region10: #{tpu_custom_call.1} parent=1 // pred_check
      _
    $region11: #{tpu_custom_call.1} parent=1 // pred_check_branch
      %43 = sbr.rel (0) target = $region13
    $region12: #{tpu_custom_call.1} parent=1 // pred_region
      %s45 = ssub.s32 128, 128
      %46 = vsyncadd [#allocation8], %s45
      %s48 = sshll.u32 [#allocation7], 4
      %s49 = int_to_ptr.vmem [resolvable:$true] %s48
      %51 = dma.hbm_to_vmem [thread:$0]  %s2, 128, %s49, [#allocation8]
    $region13: #{tpu_custom_call.1} parent=1 // pred_fallthru
      _
    // Predicated region
    $region14: #{tpu_custom_call.1} parent=1 // pred_check
      _
    $region15: #{tpu_custom_call.1} parent=1 // pred_check_branch
      %53 = sbr.rel (0) target = $region17
    $region16: #{tpu_custom_call.1} parent=1 // pred_region
      %s55 = ssub.s32 128, 128
      %56 = vsyncadd [#allocation8], %s55
      %s58 = sshll.u32 [#allocation9], 4
      %s59 = int_to_ptr.vmem [resolvable:$true] %s58
      %61 = dma.hbm_to_vmem [thread:$0]  %s3, 128, %s59, [#allocation8]
    $region17: #{tpu_custom_call.1} parent=1 // pred_fallthru
      _
    // Predicated region
    $region18: #{tpu_custom_call.1} parent=1 // pred_check
      _
    $region19: #{tpu_custom_call.1} parent=1 // pred_check_branch
      %63 = sbr.rel (0) target = $region21
    $region20: #{tpu_custom_call.1} parent=1 // pred_region
      %s65 = ssub.s32 128, 128
      %66 = vsyncadd [#allocation11], %s65
      %s68 = sshll.u32 [#allocation10], 4
      %s69 = int_to_ptr.vmem [resolvable:$true] %s68
      %71 = dma.hbm_to_vmem [thread:$0]  %s4, 128, %s69, [#allocation11]
    $region21: #{tpu_custom_call.1} parent=1 // pred_fallthru
      _
    // Predicated region
    $region22: #{tpu_custom_call.1} parent=1 // pred_check
      _
    $region23: #{tpu_custom_call.1} parent=1 // pred_check_branch
      %73 = sbr.rel (0) target = $region25
    $region24: #{tpu_custom_call.1} parent=1 // pred_region
      %74 = dma.done [#allocation5], 16
    $region25: #{tpu_custom_call.1} parent=1 // pred_fallthru
      _
    // Predicated region
    $region26: #{tpu_custom_call.1} parent=1 // pred_check
      _
    $region27: #{tpu_custom_call.1} parent=1 // pred_check_branch
      %76 = sbr.rel (0) target = $region29
    $region28: #{tpu_custom_call.1} parent=1 // pred_region
      %77 = dma.done [#allocation3], 128
    $region29: #{tpu_custom_call.1} parent=1 // pred_fallthru
      _
    // Predicated region
    $region30: #{tpu_custom_call.1} parent=1 // pred_check
      _
    $region31: #{tpu_custom_call.1} parent=1 // pred_check_branch
      %79 = sbr.rel (0) target = $region33
    $region32: #{tpu_custom_call.1} parent=1 // pred_region
      %80 = dma.done [#allocation8], 128
    $region33: #{tpu_custom_call.1} parent=1 // pred_fallthru
      _
    // Predicated region
    $region34: #{tpu_custom_call.1} parent=1 // pred_check
      _
    $region35: #{tpu_custom_call.1} parent=1 // pred_check_branch
      %82 = sbr.rel (0) target = $region37
    $region36: #{tpu_custom_call.1} parent=1 // pred_region
      %83 = dma.done [#allocation8], 128
    $region37: #{tpu_custom_call.1} parent=1 // pred_fallthru
      _
    // Predicated region
    $region38: #{tpu_custom_call.1} parent=1 // pred_check
      _
    $region39: #{tpu_custom_call.1} parent=1 // pred_check_branch
      %85 = sbr.rel (0) target = $region41
    $region40: #{tpu_custom_call.1} parent=1 // pred_region
      %86 = dma.done [#allocation11], 128
    $region41: #{tpu_custom_call.1} parent=1 // pred_fallthru
      _
    %87 = sfence
    %v88 = vld [vmem:[#allocation6] sm:$0xff]
    %s89 = sld [smem:[#allocation2]]
    %v90 = vstv %s89
    %v91 = vmul.f32 %v88, %v90
    %92 = vst [vmem:[#allocation12] sm:$0xff] %v91
    %v93 = vand.u32 2147483647, %v91
    %v94 = vld [vmem:[#allocation7] sm:$0xff]
    %s95 = sld [smem:[#allocation2 + $0x1]]
    %v96 = vstv %s95
    %v97 = vmul.f32 %v94, %v96
    %98 = vst [vmem:[#allocation13] sm:$0xff] %v97
    %v99 = vadd.f32 %v91, %v97
    %v100 = vand.u32 2147483647, %v97
    %v101 = vmax.f32 %v93, %v100
    %v102 = vld [vmem:[#allocation9] sm:$0xff]
    %s103 = sld [smem:[#allocation2 + $0x2]]
    %v104 = vstv %s103
    %v105 = vmul.f32 %v102, %v104
    %106 = vst [vmem:[#allocation15] sm:$0xff] %v105
    %v107 = vadd.f32 %v99, %v105
    %v108 = vand.u32 2147483647, %v105
    %v109 = vmax.f32 %v101, %v108
    %v110 = vld [vmem:[#allocation10] sm:$0xff]
    %s111 = sld [smem:[#allocation2 + $0x3]]
    %v112 = vstv %s111
    %v113 = vmul.f32 %v110, %v112
    %114 = vst [vmem:[#allocation16] sm:$0xff] %v113
    %v115 = vadd.f32 %v107, %v113
    %v116 = vand.u32 2147483647, %v113
    %v117 = vmax.f32 %v109, %v116
    %118 = vst [vmem:[#allocation18] sm:$0xff] %v115
    %v119 = vand.u32 2147483647, %v115
    %v120 = vmax.f32 %v117, %v119
    %121 = vmax.xlane.f32.xlu0 %v120
    %v122 = vpop.xlane.xlu0 %121
    %v123 = vrot.slane %v122, 4
    %v124 = vmax.f32 %v122, %v123
    %v125 = vrot.slane %v124, 2
    %v126 = vmax.f32 %v124, %v125
    %v127 = vrot.slane %v126, 1
    %v128 = vmax.f32 %v126, %v127
    %s129 = vtos %v128
    %v130 = vstv %s129
    %131 = vst [vmem:[#allocation19] sm:$0xff] %v130
    // Predicated region
    $region42: #{tpu_custom_call.1} parent=1 // pred_check
      _
    $region43: #{tpu_custom_call.1} parent=1 // pred_check_branch
      %133 = sbr.rel (0) target = $region45
    $region44: #{tpu_custom_call.1} parent=1 // pred_region
      %s135 = ssub.s32 128, 128
      %136 = vsyncadd [#allocation4], %s135
      %s138 = sshll.u32 [#allocation12], 4
      %s139 = int_to_ptr.vmem [resolvable:$true] %s138
      %141 = dma.vmem_to_hbm [thread:$0]  %s139, 128, %s5, [#allocation4]
    $region45: #{tpu_custom_call.1} parent=1 // pred_fallthru
      _
    // Predicated region
    $region46: #{tpu_custom_call.1} parent=1 // pred_check
      _
    $region47: #{tpu_custom_call.1} parent=1 // pred_check_branch
      %143 = sbr.rel (0) target = $region49
    $region48: #{tpu_custom_call.1} parent=1 // pred_region
      %s145 = ssub.s32 128, 128
      %146 = vsyncadd [#allocation14], %s145
      %s148 = sshll.u32 [#allocation13], 4
      %s149 = int_to_ptr.vmem [resolvable:$true] %s148
      %151 = dma.vmem_to_hbm [thread:$0]  %s149, 128, %s6, [#allocation14]
    $region49: #{tpu_custom_call.1} parent=1 // pred_fallthru
      _
    // Predicated region
    $region50: #{tpu_custom_call.1} parent=1 // pred_check
      _
    $region51: #{tpu_custom_call.1} parent=1 // pred_check_branch
      %153 = sbr.rel (0) target = $region53
    $region52: #{tpu_custom_call.1} parent=1 // pred_region
      %s155 = ssub.s32 128, 128
      %156 = vsyncadd [#allocation14], %s155
      %s158 = sshll.u32 [#allocation15], 4
      %s159 = int_to_ptr.vmem [resolvable:$true] %s158
      %161 = dma.vmem_to_hbm [thread:$0]  %s159, 128, %s7, [#allocation14]
    $region53: #{tpu_custom_call.1} parent=1 // pred_fallthru
      _
    // Predicated region
    $region54: #{tpu_custom_call.1} parent=1 // pred_check
      _
    $region55: #{tpu_custom_call.1} parent=1 // pred_check_branch
      %163 = sbr.rel (0) target = $region57
    $region56: #{tpu_custom_call.1} parent=1 // pred_region
      %s165 = ssub.s32 128, 128
      %166 = vsyncadd [#allocation17], %s165
      %s168 = sshll.u32 [#allocation16], 4
      %s169 = int_to_ptr.vmem [resolvable:$true] %s168
      %171 = dma.vmem_to_hbm [thread:$0]  %s169, 128, %s8, [#allocation17]
    $region57: #{tpu_custom_call.1} parent=1 // pred_fallthru
      _
    // Predicated region
    $region58: #{tpu_custom_call.1} parent=1 // pred_check
      _
    $region59: #{tpu_custom_call.1} parent=1 // pred_check_branch
      %173 = sbr.rel (0) target = $region61
    $region60: #{tpu_custom_call.1} parent=1 // pred_region
      %s175 = ssub.s32 128, 128
      %176 = vsyncadd [#allocation17], %s175
      %s178 = sshll.u32 [#allocation18], 4
      %s179 = int_to_ptr.vmem [resolvable:$true] %s178
      %181 = dma.vmem_to_hbm [thread:$0]  %s179, 128, %s9, [#allocation17]
    $region61: #{tpu_custom_call.1} parent=1 // pred_fallthru
      _
    // Predicated region
    $region62: #{tpu_custom_call.1} parent=1 // pred_check
      _
    $region63: #{tpu_custom_call.1} parent=1 // pred_check_branch
      %183 = sbr.rel (0) target = $region65
    $region64: #{tpu_custom_call.1} parent=1 // pred_region
      %s185 = ssub.s32 128, 128
      %186 = vsyncadd [#allocation20], %s185
      %s188 = sshll.u32 [#allocation19], 4
      %s189 = int_to_ptr.vmem [resolvable:$true] %s188
      %191 = dma.vmem_to_hbm [thread:$0]  %s189, 128, %s10, [#allocation20]
    $region65: #{tpu_custom_call.1} parent=1 // pred_fallthru
      _
    // Predicated region
    $region66: #{tpu_custom_call.1} parent=1 // pred_check
      _
    $region67: #{tpu_custom_call.1} parent=1 // pred_check_branch
      %193 = sbr.rel (0) target = $region69
    $region68: #{tpu_custom_call.1} parent=1 // pred_region
      %194 = dma.done [#allocation4], 128
    $region69: #{tpu_custom_call.1} parent=1 // pred_fallthru
      _
    // Predicated region
    $region70: #{tpu_custom_call.1} parent=1 // pred_check
      _
    $region71: #{tpu_custom_call.1} parent=1 // pred_check_branch
      %196 = sbr.rel (0) target = $region73
    $region72: #{tpu_custom_call.1} parent=1 // pred_region
      %197 = dma.done [#allocation14], 128
    $region73: #{tpu_custom_call.1} parent=1 // pred_fallthru
      _
    // Predicated region
    $region74: #{tpu_custom_call.1} parent=1 // pred_check
      _
    $region75: #{tpu_custom_call.1} parent=1 // pred_check_branch
      %199 = sbr.rel (0) target = $region77
    $region76: #{tpu_custom_call.1} parent=1 // pred_region
      %200 = dma.done [#allocation14], 128
    $region77: #{tpu_custom_call.1} parent=1 // pred_fallthru
      _
    // Predicated region
    $region78: #{tpu_custom_call.1} parent=1 // pred_check
      _
    $region79: #{tpu_custom_call.1} parent=1 // pred_check_branch
      %202 = sbr.rel (0) target = $region81
    $region80: #{tpu_custom_call.1} parent=1 // pred_region
      %203 = dma.done [#allocation17], 128
    $region81: #{tpu_custom_call.1} parent=1 // pred_fallthru
      _
    // Predicated region
    $region82: #{tpu_custom_call.1} parent=1 // pred_check
      _
    $region83: #{tpu_custom_call.1} parent=1 // pred_check_branch
      %205 = sbr.rel (0) target = $region85
    $region84: #{tpu_custom_call.1} parent=1 // pred_region
      %206 = dma.done [#allocation17], 128
    $region85: #{tpu_custom_call.1} parent=1 // pred_fallthru
      _
    // Predicated region
    $region86: #{tpu_custom_call.1} parent=1 // pred_check
      _
    $region87: #{tpu_custom_call.1} parent=1 // pred_check_branch
      %208 = sbr.rel (0) target = $region89
    $region88: #{tpu_custom_call.1} parent=1 // pred_region
      %209 = dma.done [#allocation20], 128
    $region89: #{tpu_custom_call.1} parent=1 // pred_fallthru
      _
    %210 = vsyncpa [#allocation3], 1
    %211 = vsyncpa [#allocation8], 1
    %212 = vsyncpa [#allocation11], 1
    %213 = vsyncpa [#allocation4], 1
    %214 = vsyncpa [#allocation14], 1
    %215 = vsyncpa [#allocation17], 1
    %216 = vsyncpa [#allocation20], 1
    %217 = vsyncpa [#allocation5], 1

</llo_original>
